<compile_context>
chip_gen: v7x
topology: tpu7x:2x2x1
jax: 0.10.0
libtpu: 0.0.40
codegen_flags: <defaults>
</compile_context>

<pallas_src>
import functools
import math

import jax
import jax.numpy as jnp
from jax import lax
from jax.experimental import pallas as pl
from jax.experimental.pallas import tpu as pltpu

_NEG_BIG = -1e30  # finite "-inf" stand-in (avoids inf - inf = NaN in masked math)


def _round_up(a, b):
    return (a + b - 1) // b * b


def _pick_tile(cap, full):
    """Largest power-of-two multiple of 128 that is <= min(cap, full)."""
    t = 128
    lim = min(cap, full)
    while t * 2 <= lim:
        t *= 2
    return t


def _vmem_capacity_bytes():
    try:
        info = pltpu.get_tpu_info()
        v = getattr(info, "vmem_capacity_bytes", None)
        if v:
            return int(v)
    except Exception:
        pass
    return 64 * 1024 * 1024  # conservative default (v7x per-TensorCore VMEM)


def _vmem_limit(need_bytes, cap_bytes):
    return int(min(int(cap_bytes * 0.9), max(need_bytes + (8 << 20), 32 << 20)))


# --------------------------------------------------------------------------- #
# FD term: flash-style tiled logsumexp over the (M, M) Gram matrix.
# --------------------------------------------------------------------------- #
def _fd_kernel(bias_ref, ffr_ref, ffc_ref, out_ref, m_sc, l_sc, d_sc, *,
               m_valid, mask_tail):
    i = pl.program_id(0)
    j = pl.program_id(1)
    n_j = pl.num_programs(1)
    tm = ffr_ref.shape[1]
    tn = ffc_ref.shape[1]

    @pl.when(j == 0)
    def _():
        m_sc[...] = jnp.full_like(m_sc, _NEG_BIG)
        l_sc[...] = jnp.zeros_like(l_sc)
        d_sc[...] = jnp.zeros_like(d_sc)

    # coef block (already divided by tau2, since 1/sqrt(tau2) is folded into both
    # pre-normalized operands): contract the feature axis -> (tm, tn) on the MXU,
    # f32 accumulation.
    s = lax.dot_general(ffr_ref[...], ffc_ref[...],
                        dimension_numbers=(((0,), (0,)), ((), ())),
                        preferred_element_type=jnp.float32)
    if mask_tail:
        # Single VPU pass: 0 for valid columns, -1e30 for padded columns.
        s = s + bias_ref[...]

    # ---- online logsumexp over column tiles ----
    m_prev = m_sc[...]
    m_new = jnp.maximum(m_prev, jnp.max(s, axis=1, keepdims=True))
    p = jnp.exp(s - m_new)
    # TODO-free note: jnp.sum over lanes could be rebalanced onto the MXU as a
    # matvec if profiling shows the XLUs saturating (measure-first item).
    l_sc[...] = jnp.exp(m_prev - m_new) * l_sc[...] + jnp.sum(p, axis=1,
                                                              keepdims=True)
    m_sc[...] = m_new

    # ---- actual coef diagonal, only on tiles whose row/col ranges overlap ----
    row0 = i * tm
    col0 = j * tn

    @pl.when(jnp.logical_and(row0 < col0 + tn, col0 < row0 + tm))
    def _():
        gr = row0 + lax.broadcasted_iota(jnp.int32, (tm, tn), 0)
        gc = col0 + lax.broadcasted_iota(jnp.int32, (tm, tn), 1)
        d_sc[...] += jnp.sum(jnp.where(gr == gc, s, 0.0), axis=1, keepdims=True)

    # ---- finalize this row tile ----
    @pl.when(j == n_j - 1)
    def _():
        lse = jnp.log(l_sc[...]) + m_sc[...]          # (tm, 1)
        fd_rows = lse - d_sc[...]
        if mask_tail:
            row_idx = row0 + lax.broadcasted_iota(jnp.int32, (tm, 1), 0)
            fd_rows = jnp.where(row_idx < m_valid, fd_rows, 0.0)
        out_ref[0] = jnp.full((8, 128), jnp.sum(fd_rows), dtype=jnp.float32)


def _fd_loss(ff, tau2, gram_dtype):
    d, m = ff.shape
    ff32 = ff.astype(jnp.float32)
    # One-time normalization (matches PyTorch: ff / sqrt((ff**2).sum(0))), with
    # 1/sqrt(tau2) folded in so the Gram block is already divided by tau2.
    # No eps guard: a genuinely zero column gives inf/nan, like PyTorch.
    scale = (1.0 / math.sqrt(float(tau2))) / jnp.sqrt(
        jnp.sum(ff32 * ff32, axis=0, keepdims=True))
    nff = (ff32 * scale).astype(gram_dtype)

    itemsize = jnp.dtype(gram_dtype).itemsize
    d_mult = 16 if itemsize == 2 else 8               # bf16 packs 2 rows/sublane
    d_pad = _round_up(d, d_mult)
    m128 = _round_up(m, 128)

    vmem_cap = _vmem_capacity_bytes()
    big_vmem = vmem_cap >= (96 << 20)                 # v5e/v6e: 128 MiB, v7x: 64 MiB
    tm = _pick_tile(2048 if big_vmem else 1024, m128)
    tn = _pick_tile(1024 if big_vmem else 512, m128)

    def _need(tm_, tn_):
        return (2 * d_pad * (tm_ + tn_) * itemsize    # double-buffered ff tiles
                + 6 * tm_ * tn_ * 4                   # (tm, tn) f32 temporaries
                + 3 * tm_ * 128 * 4                   # lane-padded scratch columns
                + 2 * (tn_ + 8 * 128) * 4             # bias + output blocks
                + (2 << 20))                          # headroom

    budget = int(vmem_cap * 0.75)
    while _need(tm, tn) > budget and (tm > 128 or tn > 128):
        if tm >= tn and tm > 128:
            tm //= 2
        else:
            tn //= 2

    # Keep >= 2 row tiles so both TensorCores get work when M is big enough.
    if m128 >= 256 and m128 // tm < 2:
        tm = max(128, tm // 2)

    m_pad = _round_up(m, max(tm, tn))                 # tm, tn are 2^k * 128
    n_i, n_j = m_pad // tm, m_pad // tn
    mask_tail = m_pad != m

    nff_p = jnp.pad(nff, ((0, d_pad - d), (0, m_pad - m)))
    col_bias = jnp.where(jnp.arange(m_pad) < m, 0.0,
                         _NEG_BIG).astype(jnp.float32)[None, :]

    kernel = functools.partial(_fd_kernel, m_valid=m, mask_tail=mask_tail)
    grid_spec = pltpu.PrefetchScalarGridSpec(
        num_scalar_prefetch=0,
        grid=(n_i, n_j),
        in_specs=[
            pl.BlockSpec((1, tn), lambda i, j: (0, j)),       # column-validity bias
            pl.BlockSpec((d_pad, tm), lambda i, j: (0, i)),   # ff row tile
            pl.BlockSpec((d_pad, tn), lambda i, j: (0, j)),   # ff col tile
        ],
        out_specs=pl.BlockSpec((1, 8, 128), lambda i, j: (i, 0, 0)),
        scratch_shapes=[
            pltpu.VMEM((tm, 1), jnp.float32),   # running max
            pltpu.VMEM((tm, 1), jnp.float32),   # running sum
            pltpu.VMEM((tm, 1), jnp.float32),   # actual coef diagonal
        ],
    )
    out = pl.pallas_call(
        kernel,
        out_shape=jax.ShapeDtypeStruct((n_i, 8, 128), jnp.float32),
        grid_spec=grid_spec,
        compiler_params=pltpu.CompilerParams(
            dimension_semantics=("parallel", "arbitrary"),
            vmem_limit_bytes=_vmem_limit(_need(tm, tn), vmem_cap),
        ),
    )(col_bias, nff_p, nff_p)
    return jnp.sum(out[:, 0, 0]) / m


# --------------------------------------------------------------------------- #
# ID term: cross-entropy over (N, C) logits, tiled with its own online LSE.
# --------------------------------------------------------------------------- #
def _ce_kernel(x_ref, y_ref, out_ref, m_sc, l_sc, sel_sc, *, n_valid):
    i = pl.program_id(0)
    j = pl.program_id(1)
    n_j = pl.num_programs(1)
    tr, tc = x_ref.shape

    @pl.when(j == 0)
    def _():
        m_sc[...] = jnp.full_like(m_sc, _NEG_BIG)
        l_sc[...] = jnp.zeros_like(l_sc)
        sel_sc[...] = jnp.zeros_like(sel_sc)

    xb = x_ref[...]
    if xb.dtype != jnp.float32:
        xb = xb.astype(jnp.float32)

    m_prev = m_sc[...]
    m_new = jnp.maximum(m_prev, jnp.max(xb, axis=1, keepdims=True))
    p = jnp.exp(xb - m_new)
    l_sc[...] = jnp.exp(m_prev - m_new) * l_sc[...] + jnp.sum(p, axis=1,
                                                              keepdims=True)
    m_sc[...] = m_new

    # Target-logit extraction (labels are lane-dense int32; each label falls in
    # exactly one column tile, padded classes are never selected for valid rows).
    yv = y_ref[:, :1]
    col = j * tc + lax.broadcasted_iota(jnp.int32, (tr, tc), 1)
    sel_sc[...] += jnp.sum(jnp.where(col == yv, xb, 0.0), axis=1, keepdims=True)

    @pl.when(j == n_j - 1)
    def _():
        lse = jnp.log(l_sc[...]) + m_sc[...]
        row_idx = i * tr + lax.broadcasted_iota(jnp.int32, (tr, 1), 0)
        ce_rows = jnp.where(row_idx < n_valid, lse - sel_sc[...], 0.0)
        out_ref[0] = jnp.full((8, 128), jnp.sum(ce_rows), dtype=jnp.float32)


def _ce_loss(x, y):
    n, c = x.shape
    n8 = _round_up(n, 8)
    c128 = _round_up(c, 128)

    vmem_cap = _vmem_capacity_bytes()
    tr = n8 if n8 <= 512 else 512
    tc = _pick_tile(2048, c128)

    def _need(tr_, tc_):
        return (6 * tr_ * tc_ * 4          # double-buffered x + f32 temporaries
                + 5 * tr_ * 128 * 4        # labels + scratch columns
                + 2 * 8 * 128 * 4 + (2 << 20))

    budget = int(vmem_cap * 0.75)
    while _need(tr, tc) > budget and tc > 128:
        tc //= 2

    n_pad = _round_up(n, tr)
    c_pad = _round_up(c, tc)

    # Pad logits with a large negative so padded classes/rows vanish from the LSE.
    x_p = jnp.pad(x, ((0, n_pad - n), (0, c_pad - c)), constant_values=_NEG_BIG)
    # Labels: lane-dense int32 block instead of an (N, 1) column.
    y_p = jnp.pad(y.astype(jnp.int32), (0, n_pad - n))
    y_b = jnp.tile(y_p[:, None], (1, 128))

    kernel = functools.partial(_ce_kernel, n_valid=n)
    grid_spec = pltpu.PrefetchScalarGridSpec(
        num_scalar_prefetch=0,
        grid=(n_pad // tr, c_pad // tc),
        in_specs=[
            pl.BlockSpec((tr, tc), lambda i, j: (i, j)),     # logits tile
            pl.BlockSpec((tr, 128), lambda i, j: (i, 0)),    # labels (resident)
        ],
        out_specs=pl.BlockSpec((1, 8, 128), lambda i, j: (i, 0, 0)),
        scratch_shapes=[
            pltpu.VMEM((tr, 1), jnp.float32),   # running max
            pltpu.VMEM((tr, 1), jnp.float32),   # running sum
            pltpu.VMEM((tr, 1), jnp.float32),   # selected target logit
        ],
    )
    out = pl.pallas_call(
        kernel,
        out_shape=jax.ShapeDtypeStruct((n_pad // tr, 8, 128), jnp.float32),
        grid_spec=grid_spec,
        compiler_params=pltpu.CompilerParams(
            dimension_semantics=("parallel", "arbitrary"),
            vmem_limit_bytes=_vmem_limit(_need(tr, tc), vmem_cap),
        ),
    )(x_p, y_b)
    return jnp.sum(out[:, 0, 0]) / n


def idfd_loss(x, ff, y, tau2, *, gram_dtype=jnp.bfloat16):
    """Pallas implementation of IDFDLoss.forward -> (L_id, L_fd).

    gram_dtype=jnp.bfloat16 runs the Gram matmul at full MXU rate (f32 accum,
    ~1e-3 parity); gram_dtype=jnp.float32 gives strict parity with the f32
    PyTorch forward.
    """
    l_id = _ce_loss(x, y)
    l_fd = _fd_loss(ff, tau2, gram_dtype)
    return l_id, l_fd


def _reference(x, ff, y, tau2):
    """Pure-JAX reference of the PyTorch forward (for verification)."""
    x = x.astype(jnp.float32)
    lse = jax.scipy.special.logsumexp(x, axis=1)
    l_id = jnp.mean(lse - x[jnp.arange(x.shape[0]), y])

    ff = ff.astype(jnp.float32)
    nff = ff / jnp.sqrt(jnp.sum(ff ** 2, axis=0, keepdims=True))
    coef = jnp.matmul(nff.T, nff, precision=lax.Precision.HIGHEST) / tau2
    lse2 = jax.scipy.special.logsumexp(coef, axis=1)
    l_fd = jnp.mean(lse2 - jnp.diag(coef))
    return l_id, l_fd


if __name__ == "__main__":
    key = jax.random.PRNGKey(0)
    kx, kf, ky = jax.random.split(key, 3)

    N, C = 8, 16      # batch, num classes (instance-discrimination logits)
    D, M = 32, 8      # feature dim, number of instances
    tau2 = 2.0        # temperature (module __init__ arg)

    x = jax.random.normal(kx, (N, C), dtype=jnp.float32)
    ff = jax.random.normal(kf, (D, M), dtype=jnp.float32)
    y = jax.random.randint(ky, (N,), 0, C, dtype=jnp.int32)

    r_id, r_fd = _reference(x, ff, y, tau2)

    # Default (bf16 Gram operands, f32 accumulation).
    l_id, l_fd = idfd_loss(x, ff, y, tau2)
    jax.block_until_ready((l_id, l_fd))
    assert jnp.allclose(l_id, r_id, atol=1e-5, rtol=1e-5), (l_id, r_id)
    assert jnp.allclose(l_fd, r_fd, atol=5e-3, rtol=5e-3), (l_fd, r_fd)

    # Strict-parity path (f32 Gram operands).
    l_id32, l_fd32 = idfd_loss(x, ff, y, tau2, gram_dtype=jnp.float32)
    jax.block_until_ready((l_id32, l_fd32))
    assert jnp.allclose(l_id32, r_id, atol=1e-5, rtol=1e-5), (l_id32, r_id)
    assert jnp.allclose(l_fd32, r_fd, atol=2e-3, rtol=2e-3), (l_fd32, r_fd)

    print("KERNEL_OK")
</pallas_src>

<mosaic_0001>
module attributes {stable_mosaic.version = 11 : i64} {
  func.func @_ce_kernel(%arg0: i32, %arg1: i32, %arg2: memref<8x128xf32, #tpu.memory_space<vmem>>, %arg3: memref<8x128xi32, #tpu.memory_space<vmem>>, %arg4: memref<1x8x128xf32, #tpu.memory_space<vmem>>, %arg5: memref<8x1xf32, #tpu.memory_space<vmem>>, %arg6: memref<8x1xf32, #tpu.memory_space<vmem>>, %arg7: memref<8x1xf32, #tpu.memory_space<vmem>>) attributes {dimension_semantics = [#tpu.dimension_semantics<parallel>, #tpu.dimension_semantics<arbitrary>], iteration_bounds = array<i64: 1, 1>, scalar_prefetch = 0 : i64, scratch_operands = 3 : i64, tpu.core_type = #tpu.core_type<tc>, window_params = [{transform_indices = @transform_0, window_bounds = array<i64: 8, 128>}, {transform_indices = @transform_1, window_bounds = array<i64: 8, 128>}, {transform_indices = @transform_2, window_bounds = array<i64: 1, 8, 128>}]} {
    %c0_i32 = arith.constant 0 : i32
    %0 = arith.cmpi eq, %arg1, %c0_i32 : i32
    %1 = arith.extui %0 : i1 to i32
    %c0_i32_0 = arith.constant 0 : i32
    %2 = arith.cmpi ne, %1, %c0_i32_0 : i32
    scf.if %2 {
      %cst_21 = arith.constant -1.000000e+30 : f32
      %37 = vector.broadcast %cst_21 : f32 to vector<8x1xf32>
      %c0_22 = arith.constant 0 : index
      %c0_23 = arith.constant 0 : index
      %38 = vector.load %arg5[%c0_22, %c0_23] : memref<8x1xf32, #tpu.memory_space<vmem>>, vector<8x1xf32>
      tpu.vector_store %arg5[%c0_22, %c0_23], %37 {strides = array<i32>} : memref<8x1xf32, #tpu.memory_space<vmem>>, vector<8x1xf32>,
      %cst_24 = arith.constant 0.000000e+00 : f32
      %39 = vector.broadcast %cst_24 : f32 to vector<8x1xf32>
      %c0_25 = arith.constant 0 : index
      %c0_26 = arith.constant 0 : index
      %40 = vector.load %arg6[%c0_25, %c0_26] : memref<8x1xf32, #tpu.memory_space<vmem>>, vector<8x1xf32>
      tpu.vector_store %arg6[%c0_25, %c0_26], %39 {strides = array<i32>} : memref<8x1xf32, #tpu.memory_space<vmem>>, vector<8x1xf32>,
      %cst_27 = arith.constant 0.000000e+00 : f32
      %41 = vector.broadcast %cst_27 : f32 to vector<8x1xf32>
      %c0_28 = arith.constant 0 : index
      %c0_29 = arith.constant 0 : index
      %42 = vector.load %arg7[%c0_28, %c0_29] : memref<8x1xf32, #tpu.memory_space<vmem>>, vector<8x1xf32>
      tpu.vector_store %arg7[%c0_28, %c0_29], %41 {strides = array<i32>} : memref<8x1xf32, #tpu.memory_space<vmem>>, vector<8x1xf32>,
    } else {
    }
    %c0 = arith.constant 0 : index
    %c0_1 = arith.constant 0 : index
    %3 = vector.load %arg2[%c0, %c0_1] : memref<8x128xf32, #tpu.memory_space<vmem>>, vector<8x128xf32>
    %c0_2 = arith.constant 0 : index
    %c0_3 = arith.constant 0 : index
    %4 = vector.load %arg5[%c0_2, %c0_3] : memref<8x1xf32, #tpu.memory_space<vmem>>, vector<8x1xf32>
    %cst = arith.constant dense<0xFF800000> : vector<8xf32>
    %5 = vector.multi_reduction <maximumf>, %3, %cst [1] : vector<8x128xf32> to vector<8xf32>
    %6 = vector.shape_cast %5 : vector<8xf32> to vector<8x1xf32>
    %7 = arith.maximumf %4, %6 : vector<8x1xf32>
    %8 = vector.broadcast %7 : vector<8x1xf32> to vector<8x128xf32>
    %9 = arith.subf %3, %8 : vector<8x128xf32>
    %10 = math.exp %9 : vector<8x128xf32>
    %11 = arith.subf %4, %7 : vector<8x1xf32>
    %12 = math.exp %11 : vector<8x1xf32>
    %c0_4 = arith.constant 0 : index
    %c0_5 = arith.constant 0 : index
    %13 = vector.load %arg6[%c0_4, %c0_5] : memref<8x1xf32, #tpu.memory_space<vmem>>, vector<8x1xf32>
    %14 = arith.mulf %12, %13 : vector<8x1xf32>
    %cst_6 = arith.constant dense<0.000000e+00> : vector<8xf32>
    %15 = vector.multi_reduction <add>, %10, %cst_6 [1] : vector<8x128xf32> to vector<8xf32>
    %16 = vector.shape_cast %15 : vector<8xf32> to vector<8x1xf32>
    %17 = arith.addf %14, %16 : vector<8x1xf32>
    %c0_7 = arith.constant 0 : index
    %c0_8 = arith.constant 0 : index
    %18 = vector.load %arg6[%c0_7, %c0_8] : memref<8x1xf32, #tpu.memory_space<vmem>>, vector<8x1xf32>
    tpu.vector_store %arg6[%c0_7, %c0_8], %17 {strides = array<i32>} : memref<8x1xf32, #tpu.memory_space<vmem>>, vector<8x1xf32>,
    %c0_9 = arith.constant 0 : index
    %c0_10 = arith.constant 0 : index
    %19 = vector.load %arg5[%c0_9, %c0_10] : memref<8x1xf32, #tpu.memory_space<vmem>>, vector<8x1xf32>
    tpu.vector_store %arg5[%c0_9, %c0_10], %7 {strides = array<i32>} : memref<8x1xf32, #tpu.memory_space<vmem>>, vector<8x1xf32>,
    %c0_11 = arith.constant 0 : index
    %c0_12 = arith.constant 0 : index
    %20 = vector.load %arg3[%c0_11, %c0_12] : memref<8x128xi32, #tpu.memory_space<vmem>>, vector<8x1xi32>
    %c128_i32 = arith.constant 128 : i32
    %21 = arith.muli %arg1, %c128_i32 : i32
    %22 = tpu.iota {dimensions = array<i32: 1>} : vector<8x128xi32>
    %23 = vector.broadcast %21 : i32 to vector<8x128xi32>
    %24 = arith.addi %23, %22 : vector<8x128xi32>
    %c0_13 = arith.constant 0 : index
    %c0_14 = arith.constant 0 : index
    %25 = vector.load %arg7[%c0_13, %c0_14] : memref<8x1xf32, #tpu.memory_space<vmem>>, vector<8x1xf32>
    %26 = vector.broadcast %20 : vector<8x1xi32> to vector<8x128xi32>
    %27 = arith.cmpi eq, %24, %26 : vector<8x128xi32>
    %cst_15 = arith.constant 0.000000e+00 : f32
    %28 = vector.broadcast %cst_15 : f32 to vector<8x128xf32>
    %29 = arith.select %27, %3, %28 : vector<8x128xi1>, vector<8x128xf32>
    %cst_16 = arith.constant dense<0.000000e+00> : vector<8xf32>
    %30 = vector.multi_reduction <add>, %29, %cst_16 [1] : vector<8x128xf32> to vector<8xf32>
    %31 = vector.shape_cast %30 : vector<8xf32> to vector<8x1xf32>
    %32 = arith.addf %25, %31 : vector<8x1xf32>
    %c0_17 = arith.constant 0 : index
    %c0_18 = arith.constant 0 : index
    %33 = vector.load %arg7[%c0_17, %c0_18] : memref<8x1xf32, #tpu.memory_space<vmem>>, vector<8x1xf32>
    tpu.vector_store %arg7[%c0_17, %c0_18], %32 {strides = array<i32>} : memref<8x1xf32, #tpu.memory_space<vmem>>, vector<8x1xf32>,
    %c0_i32_19 = arith.constant 0 : i32
    %34 = arith.cmpi eq, %arg1, %c0_i32_19 : i32
    %35 = arith.extui %34 : i1 to i32
    %c0_i32_20 = arith.constant 0 : i32
    %36 = arith.cmpi ne, %35, %c0_i32_20 : i32
    scf.if %36 {
      %c0_21 = arith.constant 0 : index
      %c0_22 = arith.constant 0 : index
      %37 = vector.load %arg6[%c0_21, %c0_22] : memref<8x1xf32, #tpu.memory_space<vmem>>, vector<8x1xf32>
      %38 = math.log %37 : vector<8x1xf32>
      %c0_23 = arith.constant 0 : index
      %c0_24 = arith.constant 0 : index
      %39 = vector.load %arg5[%c0_23, %c0_24] : memref<8x1xf32, #tpu.memory_space<vmem>>, vector<8x1xf32>
      %40 = arith.addf %38, %39 : vector<8x1xf32>
      %c8_i32 = arith.constant 8 : i32
      %41 = arith.muli %arg0, %c8_i32 : i32
      %42 = tpu.iota {dimensions = array<i32: 0>} : vector<8x1xi32>
      %43 = vector.broadcast %41 : i32 to vector<8x1xi32>
      %44 = arith.addi %43, %42 : vector<8x1xi32>
      %c8_i32_25 = arith.constant 8 : i32
      %45 = vector.broadcast %c8_i32_25 : i32 to vector<8x1xi32>
      %46 = arith.cmpi slt, %44, %45 : vector<8x1xi32>
      %c0_26 = arith.constant 0 : index
      %c0_27 = arith.constant 0 : index
      %47 = vector.load %arg7[%c0_26, %c0_27] : memref<8x1xf32, #tpu.memory_space<vmem>>, vector<8x1xf32>
      %48 = arith.subf %40, %47 : vector<8x1xf32>
      %cst_28 = arith.constant 0.000000e+00 : f32
      %49 = vector.broadcast %cst_28 : f32 to vector<8x1xf32>
      %50 = arith.select %46, %48, %49 : vector<8x1xi1>, vector<8x1xf32>
      %51 = vector.shape_cast %50 : vector<8x1xf32> to vector<1x8x1xf32>
      %cst_29 = arith.constant dense<0.000000e+00> : vector<1xf32>
      %52 = vector.multi_reduction <add>, %51, %cst_29 [1, 2] : vector<1x8x1xf32> to vector<1xf32>
      %53 = vector.shape_cast %52 : vector<1xf32> to vector<1x1x1xf32>
      %54 = vector.extract %53[0, 0, 0] : f32 from vector<1x1x1xf32>
      %55 = vector.broadcast %54 : f32 to vector<8x128xf32>
      %c0_30 = arith.constant 0 : index
      %c0_31 = arith.constant 0 : index
      %c0_32 = arith.constant 0 : index
      %56 = vector.load %arg4[%c0_30, %c0_31, %c0_32] : memref<1x8x128xf32, #tpu.memory_space<vmem>>, vector<1x8x128xf32>
      %57 = vector.shape_cast %56 : vector<1x8x128xf32> to vector<8x128xf32>
      %58 = vector.shape_cast %55 : vector<8x128xf32> to vector<1x8x128xf32>
      tpu.vector_store %arg4[%c0_30, %c0_31, %c0_32], %58 {strides = array<i32>} : memref<1x8x128xf32, #tpu.memory_space<vmem>>, vector<1x8x128xf32>,
    } else {
    }
    return
  }
  func.func @transform_0(%arg0: i32, %arg1: i32) -> (i32, i32) {
    %c0_i32 = arith.constant 0 : i32
    return %arg0, %arg1 : i32, i32
  }
  func.func @transform_1(%arg0: i32, %arg1: i32) -> (i32, i32) {
    %c0_i32 = arith.constant 0 : i32
    %c0_i32_0 = arith.constant 0 : i32
    return %arg0, %c0_i32 : i32, i32
  }
  func.func @transform_2(%arg0: i32, %arg1: i32) -> (i32, i32, i32) {
    %c0_i32 = arith.constant 0 : i32
    %c0_i32_0 = arith.constant 0 : i32
    %c0_i32_1 = arith.constant 0 : i32
    return %arg0, %c0_i32, %c0_i32_0 : i32, i32, i32
  }
}

</mosaic_0001>

<llo_original>
// kernel: tpu_custom_call.1
$region0: #{tpu_custom_call.1}
  #allocation0 [shape = 'u32[]', space=smem, size = 0x4, offset = 0x4, fixed_abs, tag = 'smem constant byte address 0x4 - core index']
  #allocation1 [shape = 'u32[144,128]{1,0:T(1,128)}', space=vmem, size = 0x12000, scoped, tag = 'internal scratch']
  #allocation2 [shape = 'f32[8,1]{1,0:T(8,128)}', space=vmem, size = 0x1000, scoped, tag = 'scratch operand']
  #allocation3 [shape = 'f32[8,1]{1,0:T(8,128)}', space=vmem, size = 0x1000, scoped, tag = 'scratch operand']
  #allocation4 [shape = 'f32[8,1]{1,0:T(8,128)}', space=vmem, size = 0x1000, scoped, tag = 'scratch operand']
  %s0 = inlined_call_operand.hbm [shape: f32[8,128], index: 0, kind: input, shape index: {}]
  %s1 = inlined_call_operand.hbm [shape: s32[8,128], index: 1, kind: input, shape index: {}]
  %s2 = inlined_call_operand.hbm [shape: f32[1,8,128], index: 2, kind: output, shape index: {}]
  %s3 = sld [smem:[#allocation0]]
  $region34: #{tpu_custom_call.1} parent=0
    _
  %s5 = ssub.s32 1, %s3
  %s6 = scalar_select 0, %s5, %s3
  $region1: #{tpu_custom_call.1} parent=0
    #allocation5 [shape = 'u8[4096]{0}', space=vmem, size = 0x1000, scoped, tag = 'input window, operand 0, single buffered']
    #allocation6 [shape = 's32[1]{0}', space=sflag, size = 0x4, scoped, tag = 'scoped memory for tpu_custom_call.1']
    #allocation7 [shape = 's32[1]{0}', space=sflag, size = 0x4, scoped, tag = 'scoped memory for tpu_custom_call.1']
    #allocation8 [shape = 'u8[4096]{0}', space=vmem, size = 0x1000, scoped, tag = 'input window, operand 1, single buffered']
    #allocation9 [shape = 's32[1]{0}', space=sflag, size = 0x4, scoped, tag = 'scoped memory for tpu_custom_call.1']
    #allocation10 [shape = 'u8[4096]{0}', space=vmem, size = 0x1000, scoped, tag = 'output window, operand 0, single buffered']
    %7 = vsyncpa [#allocation6], 0
    %8 = vsyncpa [#allocation9], 0
    %9 = vsyncpa [#allocation7], 0
    // Predicated region
    $region2: #{tpu_custom_call.1} parent=1 // pred_check
      _
    $region3: #{tpu_custom_call.1} parent=1 // pred_check_branch
      %11 = sbr.rel (0) target = $region5
    $region4: #{tpu_custom_call.1} parent=1 // pred_region
      %s13 = ssub.s32 128, 128
      %14 = vsyncadd [#allocation6], %s13
      %s16 = sshll.u32 [#allocation5], 4
      %s17 = int_to_ptr.vmem [resolvable:$true] %s16
      %19 = dma.hbm_to_vmem [thread:$0]  %s0, 128, %s17, [#allocation6]
    $region5: #{tpu_custom_call.1} parent=1 // pred_fallthru
      _
    // Predicated region
    $region6: #{tpu_custom_call.1} parent=1 // pred_check
      _
    $region7: #{tpu_custom_call.1} parent=1 // pred_check_branch
      %21 = sbr.rel (0) target = $region9
    $region8: #{tpu_custom_call.1} parent=1 // pred_region
      %s23 = ssub.s32 128, 128
      %24 = vsyncadd [#allocation9], %s23
      %s26 = sshll.u32 [#allocation8], 4
      %s27 = int_to_ptr.vmem [resolvable:$true] %s26
      %29 = dma.hbm_to_vmem [thread:$0]  %s1, 128, %s27, [#allocation9]
    $region9: #{tpu_custom_call.1} parent=1 // pred_fallthru
      _
    // Predicated region
    $region10: #{tpu_custom_call.1} parent=1 // pred_check
      _
    $region11: #{tpu_custom_call.1} parent=1 // pred_check_branch
      %31 = sbr.rel (0) target = $region13
    $region12: #{tpu_custom_call.1} parent=1 // pred_region
      %32 = dma.done [#allocation6], 128
    $region13: #{tpu_custom_call.1} parent=1 // pred_fallthru
      _
    // Predicated region
    $region14: #{tpu_custom_call.1} parent=1 // pred_check
      _
    $region15: #{tpu_custom_call.1} parent=1 // pred_check_branch
      %34 = sbr.rel (0) target = $region17
    $region16: #{tpu_custom_call.1} parent=1 // pred_region
      %35 = dma.done [#allocation9], 128
    $region17: #{tpu_custom_call.1} parent=1 // pred_fallthru
      _
    %p36 = scmp.eq.s32.totalorder 0, 0
    // Predicated region
    $region18: #{tpu_custom_call.1} parent=1 // pred_check
      %p37 = pneg %p36
    $region19: #{tpu_custom_call.1} parent=1 // pred_check_branch
      %39 = sbr.rel (%p37) target = $region21
    $region20: #{tpu_custom_call.1} parent=1 // pred_region
      %vm40 = vcmask 7168
      %41 = vst.msk [vmem:[#allocation2] sm:$0xff] %vm40, -1e+30
      %42 = vst.msk [vmem:[#allocation3] sm:$0xff] %vm40, 0.0
      %43 = vst.msk [vmem:[#allocation4] sm:$0xff] %vm40, 0.0
    $region21: #{tpu_custom_call.1} parent=1 // pred_fallthru
      _
    %v44 = vld [vmem:[#allocation5] sm:$0xff]
    %v45 = vld [vmem:[#allocation2] sm:$0xff]
    %46 = vmax.xlane.f32.xlu0 %v44
    %v47 = vpop.xlane.xlu0 %46
    %v48 = vmax.f32 %v45, %v47
    %50 = vset.pattern.permute.xlu0 0
    %51 = vperm.xlu0 %50, %v48
    %v52 = vpop.permute.xlu0 %51
    %v54 = vsub.f32 %v44, %v52
    %v55 = vmul.f32 %v54, 1.442695
    %v56 = vpow.pop %v55
    %v57 = vsub.f32 %v45, %v48
    %v58 = vmul.f32 %v57, 1.442695
    %v59 = vpow.pop %v58
    %v60 = vld [vmem:[#allocation3] sm:$0xff]
    %v61 = vmul.f32 %v59, %v60
    %62 = vadd.xlane.f32.xlu0 %v56
    %v63 = vpop.xlane.xlu0 %62
    %v64 = vadd.f32 %v61, %v63
    %vm65 = vcmask 7168
    %66 = vst.msk [vmem:[#allocation3] sm:$0xff] %vm65, %v64
    %67 = vst.msk [vmem:[#allocation2] sm:$0xff] %vm65, %v48
    %v68 = vld [vmem:[#allocation8] sm:$0xff]
    %s69 = smul.u32 0, 128
    %v70 = vlaneseq
    %v71 = vand.u32 %v70, 127
    %v72 = vstv %s69
    %v73 = vadd.s32 %v72, %v71
    %v74 = vld [vmem:[#allocation4] sm:$0xff]
    %75 = vset.pattern.permute.xlu0 0
    %76 = vperm.xlu0 %75, %v68
    %v77 = vpop.permute.xlu0 %76
    %vm78 = vcmp.eq.s32.totalorder %v73, %v77
    %v79 = vsel %vm78, %v44, 0.0
    %80 = vadd.xlane.f32.xlu0 %v79
    %v81 = vpop.xlane.xlu0 %80
    %v82 = vadd.f32 %v74, %v81
    %83 = vst.msk [vmem:[#allocation4] sm:$0xff] %vm65, %v82
    // Predicated region
    $region22: #{tpu_custom_call.1} parent=1 // pred_check
      %p84 = pneg %p36
    $region23: #{tpu_custom_call.1} parent=1 // pred_check_branch
      %86 = sbr.rel (%p84) target = $region25
    $region24: #{tpu_custom_call.1} parent=1 // pred_region
      %v87 = vld [vmem:[#allocation3] sm:$0xff]
      %v88 = vlog2.pop %v87
      %v89 = vmul.f32 %v88, 0.6931472
      %v90 = vld [vmem:[#allocation2] sm:$0xff]
      %v91 = vadd.f32 %v89, %v90
      %s92 = smul.u32 0, 8
      %v93 = vlaneseq
      %v94 = vshrl.u32 %v93, 7
      %v95 = vstv %s92
      %v96 = vadd.s32 %v95, %v94
      %vm97 = vcmp.lt.s32.totalorder %v96, 8
      %v98 = vld [vmem:[#allocation4] sm:$0xff]
      %v99 = vsub.f32 %v91, %v98
      %v100 = vsel %vm97, %v99, 0.0
      %v101 = vsel %vm65, %v100, 0.0
      %102 = vadd.xlane.f32.xlu0 %v101
      %v103 = vpop.xlane.xlu0 %102
      %v104 = vrot.slane %v103, 4
      %v105 = vadd.f32 %v103, %v104
      %v106 = vrot.slane %v105, 2
      %v107 = vadd.f32 %v105, %v106
      %v108 = vrot.slane %v107, 1
      %v109 = vadd.f32 %v107, %v108
      %s110 = vtos %v109
      %v111 = vstv %s110
      %112 = vst [vmem:[#allocation10] sm:$0xff] %v111
    $region25: #{tpu_custom_call.1} parent=1 // pred_fallthru
      _
    // Predicated region
    $region26: #{tpu_custom_call.1} parent=1 // pred_check
      _
    $region27: #{tpu_custom_call.1} parent=1 // pred_check_branch
      %114 = sbr.rel (0) target = $region29
    $region28: #{tpu_custom_call.1} parent=1 // pred_region
      %s116 = ssub.s32 128, 128
      %117 = vsyncadd [#allocation7], %s116
      %s119 = sshll.u32 [#allocation10], 4
      %s120 = int_to_ptr.vmem [resolvable:$true] %s119
      %122 = dma.vmem_to_hbm [thread:$0]  %s120, 128, %s2, [#allocation7]
    $region29: #{tpu_custom_call.1} parent=1 // pred_fallthru
      _
    // Predicated region
    $region30: #{tpu_custom_call.1} parent=1 // pred_check
      _
    $region31: #{tpu_custom_call.1} parent=1 // pred_check_branch
      %124 = sbr.rel (0) target = $region33
    $region32: #{tpu_custom_call.1} parent=1 // pred_region
      %125 = dma.done [#allocation7], 128
    $region33: #{tpu_custom_call.1} parent=1 // pred_fallthru
      _
    %126 = vsyncpa [#allocation6], 1
    %127 = vsyncpa [#allocation9], 1
    %128 = vsyncpa [#allocation7], 1

</llo_original>
